<compile_context>
chip_gen: v7x
topology: tpu7x:2x2x1
jax: 0.10.0
libtpu: 0.0.40
codegen_flags: <defaults>
</compile_context>

<pallas_src>
import functools

import jax
import jax.numpy as jnp
from jax import lax
from jax.experimental import pallas as pl
from jax.experimental.pallas import tpu as pltpu

_LANES = 128


def _ce_focal_kernel(logits_ref, labels_ref, partial_ref, *, gamma, n_total,
                     tile_n, mask_tail):
    """One batch tile -> lane-broadcast partial sum of focal-modulated CE."""
    x = logits_ref[...]                                   # (tile_n, C), input dtype
    labels = labels_ref[...]                              # (tile_n, 1) int32

    # --- per-row log-sum-exp (single fused f32 elementwise pass, no `shifted` temp) ---
    row_max = jnp.max(x, axis=-1, keepdims=True).astype(jnp.float32)      # (tile_n, 1)
    sumexp = jnp.sum(jnp.exp(x.astype(jnp.float32) - row_max),
                     axis=-1, keepdims=True)                               # (tile_n, 1)

    # --- target-logit gather in the source dtype (exactly one non-zero per row,
    #     so the reduction is exact even in bf16), then cast the per-row scalar ---
    col_idx = lax.broadcasted_iota(jnp.int32, x.shape, 1)
    zero = jnp.array(0, dtype=x.dtype)
    tgt = jnp.sum(jnp.where(col_idx == labels, x, zero),
                  axis=-1, keepdims=True).astype(jnp.float32)              # (tile_n, 1)

    ce = (jnp.log(sumexp) + row_max) - tgt                                 # (tile_n, 1)

    # --- focal modulation: (1 - p)^gamma * ce,  p = exp(-ce) ---
    p = jnp.exp(-ce)
    one_m_p = 1.0 - p
    g = float(gamma)
    if g == 0.0:
        mod = jnp.ones_like(one_m_p)
    elif g == float(int(g)) and 1 <= int(g) <= 8:
        mod = one_m_p                                     # repeated-multiply fast path (VPU)
        for _ in range(int(g) - 1):
            mod = mod * one_m_p
    else:
        # f32 rounding can make ce slightly negative -> (1 - p) < 0 -> NaN in pow.
        mod = jnp.maximum(one_m_p, 0.0) ** g
    focal = mod * ce                                       # (tile_n, 1)

    if mask_tail:
        # Only emitted when N % tile_n != 0. True select (not multiply) so NaN/Inf
        # from the padded trailing tile never reaches the partial sum.
        row0 = pl.program_id(0) * tile_n
        row_idx = row0 + lax.broadcasted_iota(jnp.int32, focal.shape, 0)
        focal = jnp.where(row_idx < n_total, focal, 0.0)

    # Lane-dense write of the per-tile partial sum.
    tile_sum = jnp.sum(focal, keepdims=True)               # (1, 1)
    partial_ref[...] = jnp.broadcast_to(tile_sum, (1, _LANES))


def _vmem_params():
    """Per-generation (vmem_limit_bytes, working-set budget)."""
    cap = None
    try:
        info = pltpu.get_tpu_info()
        cap = getattr(info, "vmem_capacity_bytes", None)
    except Exception:
        cap = None
    if cap is None:
        cap = 64 * 1024 * 1024                 # be conservative (v7x-sized VMEM)
    if cap <= 64 * 1024 * 1024:                # v7x-class: 64 MiB physical per TC
        limit = 48 * 1024 * 1024
    else:                                      # v5e / v6e: 128 MiB physical
        limit = 64 * 1024 * 1024
    budget = limit // 2                        # headroom for iotas, output, compiler scratch
    return limit, budget


def _choose_tile_n(n, c, itemsize, budget_bytes):
    """Largest multiple-of-8 row tile whose working set fits the budget.

    Per-row bytes accounted:
      2 * C * itemsize   double-buffered logits input
      2 * C * 4          f32 elementwise margin (the fused exp/reduce pass)
      2 * 128 * 4        double-buffered labels block ((tile_n, 1) pads to 128 lanes)
    """
    per_row = 2 * c * itemsize + 2 * c * 4 + 2 * _LANES * 4
    rows = budget_bytes // max(1, per_row)
    rows = max(8, (rows // 8) * 8)
    rows = min(rows, 32768)                    # bound label-padding / iota temporaries
    return n if rows >= n else rows            # full-dim block is always legal


def ce_focal_loss(cls_score, label, *, gamma=2.0, reduction="mean", tile_n=None):
    """cls_score: (N, C) logits (f32 or bf16); label: (N,) int.

    Returns scalar focal CE reduced with `reduction` ('mean' or 'sum')."""
    assert reduction in ("mean", "sum")
    n, c = cls_score.shape
    labels_2d = label.astype(jnp.int32).reshape(n, 1)

    vmem_limit, budget = _vmem_params()
    if tile_n is None:
        tile_n = _choose_tile_n(n, c, jnp.dtype(cls_score.dtype).itemsize, budget)
    tile_n = int(tile_n)
    num_tiles = pl.cdiv(n, tile_n)
    mask_tail = (n % tile_n) != 0

    kernel = functools.partial(
        _ce_focal_kernel, gamma=float(gamma), n_total=n, tile_n=tile_n,
        mask_tail=mask_tail)

    partials = pl.pallas_call(
        kernel,
        out_shape=jax.ShapeDtypeStruct((num_tiles, _LANES), jnp.float32),
        grid=(num_tiles,),
        in_specs=[
            pl.BlockSpec((tile_n, c), lambda i: (i, 0)),   # logits tile (input dtype)
            pl.BlockSpec((tile_n, 1), lambda i: (i, 0)),   # labels tile
        ],
        out_specs=pl.BlockSpec((1, _LANES), lambda i: (i, 0)),
        compiler_params=pltpu.CompilerParams(
            dimension_semantics=("parallel",),             # shard grid across TCs where possible
            vmem_limit_bytes=vmem_limit,
        ),
    )(cls_score, labels_2d)

    total = jnp.sum(partials[:, 0])
    if reduction == "mean":
        return total / jnp.float32(n)
    return total


def _reference(cls_score, label, gamma=2.0, reduction="mean"):
    # pure-JAX reference of the PyTorch forward.
    logp = jax.nn.log_softmax(cls_score.astype(jnp.float32), axis=-1)
    ce = -jnp.take_along_axis(logp, label[:, None].astype(jnp.int32), axis=-1)[:, 0]
    p = jnp.exp(-ce)
    loss = (1.0 - p) ** gamma * ce
    return jnp.mean(loss) if reduction == "mean" else jnp.sum(loss)


if __name__ == "__main__":
    key = jax.random.PRNGKey(0)
    k1, k2, k3, k4 = jax.random.split(key, 4)

    # Case 1: tiny aligned shape (single block), f32, default gamma.
    N1, C1 = 8, 16
    x1 = jax.random.normal(k1, (N1, C1), dtype=jnp.float32)
    y1 = jax.random.randint(k2, (N1,), 0, C1, dtype=jnp.int32)
    loss1 = ce_focal_loss(x1, y1, gamma=2.0)
    jax.block_until_ready(loss1)
    ref1 = _reference(x1, y1, gamma=2.0)
    assert jnp.allclose(loss1, ref1, rtol=1e-5, atol=1e-5), (loss1, ref1)

    # Case 2: non-aligned N with forced small tile -> exercises grid tiling,
    # parallel partial sums, and masking of the padded trailing tile. f32.
    N2, C2 = 37, 21
    x2 = jax.random.normal(k3, (N2, C2), dtype=jnp.float32)
    y2 = jax.random.randint(k4, (N2,), 0, C2, dtype=jnp.int32)
    loss2 = ce_focal_loss(x2, y2, gamma=2.0, tile_n=16)
    jax.block_until_ready(loss2)
    ref2 = _reference(x2, y2, gamma=2.0)
    assert jnp.allclose(loss2, ref2, rtol=1e-5, atol=1e-5), (loss2, ref2)

    # Case 3: bf16 logits passed straight through (no wrapper upcast).
    x3 = x2.astype(jnp.bfloat16)
    loss3 = ce_focal_loss(x3, y2, gamma=2.0, tile_n=16)
    jax.block_until_ready(loss3)
    ref3 = _reference(x3.astype(jnp.float32), y2, gamma=2.0)
    assert jnp.allclose(loss3, ref3, rtol=1e-5, atol=1e-5), (loss3, ref3)

    # Case 4: non-integer gamma (exercises the clamped pow path) + 'sum' reduction.
    loss4 = ce_focal_loss(x2, y2, gamma=1.5, reduction="sum", tile_n=16)
    jax.block_until_ready(loss4)
    ref4 = _reference(x2, y2, gamma=1.5, reduction="sum")
    assert jnp.allclose(loss4, ref4, rtol=1e-4, atol=1e-4), (loss4, ref4)

    print("KERNEL_OK")
</pallas_src>

<mosaic_0001>
module attributes {stable_mosaic.version = 11 : i64} {
  func.func @_ce_focal_kernel(%arg0: i32, %arg1: memref<8x16xf32, #tpu.memory_space<vmem>>, %arg2: memref<8x1xi32, #tpu.memory_space<vmem>>, %arg3: memref<1x128xf32, #tpu.memory_space<vmem>>) attributes {dimension_semantics = [#tpu.dimension_semantics<parallel>], iteration_bounds = array<i64: 1>, scalar_prefetch = 0 : i64, scratch_operands = 0 : i64, tpu.core_type = #tpu.core_type<tc>, window_params = [{transform_indices = @transform_0, window_bounds = array<i64: 8, 16>}, {transform_indices = @transform_1, window_bounds = array<i64: 8, 1>}, {transform_indices = @transform_2, window_bounds = array<i64: 1, 128>}]} {
    %c0 = arith.constant 0 : index
    %c0_0 = arith.constant 0 : index
    %0 = vector.load %arg1[%c0, %c0_0] : memref<8x16xf32, #tpu.memory_space<vmem>>, vector<8x16xf32>
    %c0_1 = arith.constant 0 : index
    %c0_2 = arith.constant 0 : index
    %1 = vector.load %arg2[%c0_1, %c0_2] : memref<8x1xi32, #tpu.memory_space<vmem>>, vector<8x1xi32>
    %cst = arith.constant dense<0xFF800000> : vector<8xf32>
    %2 = vector.multi_reduction <maximumf>, %0, %cst [1] : vector<8x16xf32> to vector<8xf32>
    %3 = vector.shape_cast %2 : vector<8xf32> to vector<8x1xf32>
    %4 = vector.broadcast %3 : vector<8x1xf32> to vector<8x16xf32>
    %5 = arith.subf %0, %4 : vector<8x16xf32>
    %6 = math.exp %5 : vector<8x16xf32>
    %cst_3 = arith.constant dense<0.000000e+00> : vector<8xf32>
    %7 = vector.multi_reduction <add>, %6, %cst_3 [1] : vector<8x16xf32> to vector<8xf32>
    %8 = vector.shape_cast %7 : vector<8xf32> to vector<8x1xf32>
    %9 = tpu.iota {dimensions = array<i32: 1>} : vector<8x16xi32>
    %10 = vector.broadcast %1 : vector<8x1xi32> to vector<8x16xi32>
    %11 = arith.cmpi eq, %9, %10 : vector<8x16xi32>
    %cst_4 = arith.constant 0.000000e+00 : f32
    %12 = vector.broadcast %cst_4 : f32 to vector<8x16xf32>
    %13 = arith.select %11, %0, %12 : vector<8x16xi1>, vector<8x16xf32>
    %cst_5 = arith.constant dense<0.000000e+00> : vector<8xf32>
    %14 = vector.multi_reduction <add>, %13, %cst_5 [1] : vector<8x16xf32> to vector<8xf32>
    %15 = vector.shape_cast %14 : vector<8xf32> to vector<8x1xf32>
    %16 = math.log %8 : vector<8x1xf32>
    %17 = arith.addf %16, %3 : vector<8x1xf32>
    %18 = arith.subf %17, %15 : vector<8x1xf32>
    %cst_6 = arith.constant 0.000000e+00 : f32
    %19 = vector.broadcast %cst_6 : f32 to vector<8x1xf32>
    %20 = arith.subf %19, %18 : vector<8x1xf32>
    %21 = math.exp %20 : vector<8x1xf32>
    %cst_7 = arith.constant 1.000000e+00 : f32
    %22 = vector.broadcast %cst_7 : f32 to vector<8x1xf32>
    %23 = arith.subf %22, %21 : vector<8x1xf32>
    %24 = arith.mulf %23, %23 : vector<8x1xf32>
    %25 = arith.mulf %24, %18 : vector<8x1xf32>
    %26 = vector.shape_cast %25 : vector<8x1xf32> to vector<1x8x1xf32>
    %cst_8 = arith.constant dense<0.000000e+00> : vector<1xf32>
    %27 = vector.multi_reduction <add>, %26, %cst_8 [1, 2] : vector<1x8x1xf32> to vector<1xf32>
    %28 = vector.shape_cast %27 : vector<1xf32> to vector<1x1x1xf32>
    %29 = vector.extract %28[0, 0, 0] : f32 from vector<1x1x1xf32>
    %30 = vector.broadcast %29 : f32 to vector<1x1xf32>
    %31 = vector.shape_cast %30 : vector<1x1xf32> to vector<1x1xf32>
    %32 = vector.broadcast %31 : vector<1x1xf32> to vector<1x128xf32>
    %c0_9 = arith.constant 0 : index
    %c0_10 = arith.constant 0 : index
    %33 = vector.load %arg3[%c0_9, %c0_10] : memref<1x128xf32, #tpu.memory_space<vmem>>, vector<1x128xf32>
    tpu.vector_store %arg3[%c0_9, %c0_10], %32 {strides = array<i32>} : memref<1x128xf32, #tpu.memory_space<vmem>>, vector<1x128xf32>,
    return
  }
  func.func @transform_0(%arg0: i32) -> (i32, i32) {
    %c0_i32 = arith.constant 0 : i32
    %c0_i32_0 = arith.constant 0 : i32
    return %arg0, %c0_i32 : i32, i32
  }
  func.func @transform_1(%arg0: i32) -> (i32, i32) {
    %c0_i32 = arith.constant 0 : i32
    %c0_i32_0 = arith.constant 0 : i32
    return %arg0, %c0_i32 : i32, i32
  }
  func.func @transform_2(%arg0: i32) -> (i32, i32) {
    %c0_i32 = arith.constant 0 : i32
    %c0_i32_0 = arith.constant 0 : i32
    return %arg0, %c0_i32 : i32, i32
  }
}

</mosaic_0001>

<llo_original>
// kernel: tpu_custom_call.1
$region0: #{tpu_custom_call.1}
  #allocation0 [shape = 'u32[]', space=smem, size = 0x4, offset = 0x4, fixed_abs, tag = 'smem constant byte address 0x4 - core index']
  #allocation1 [shape = 'u32[144,128]{1,0:T(1,128)}', space=vmem, size = 0x12000, scoped, tag = 'internal scratch']
  %s0 = inlined_call_operand.vmem [shape: f32[8,16], index: 0, kind: input, shape index: {}]
  %s1 = inlined_call_operand.vmem [shape: s32[8,1], index: 1, kind: input, shape index: {}]
  %s2 = inlined_call_operand.hbm [shape: f32[1,128], index: 2, kind: output, shape index: {}]
  %s3 = sld [smem:[#allocation0]]
  $region18: #{tpu_custom_call.1} parent=0
    _
  %s5 = ssub.s32 1, %s3
  %s6 = scalar_select 0, %s5, %s3
  $region1: #{tpu_custom_call.1} parent=0
    #allocation2 [shape = 'u8[512]{0}', space=vmem, size = 0x400, scoped, tag = 'output window, operand 0, single buffered']
    #allocation3 [shape = 's32[1]{0}', space=sflag, size = 0x4, scoped, tag = 'scoped memory for tpu_custom_call.1']
    %7 = vsyncpa [#allocation3], 0
    // Predicated region
    $region2: #{tpu_custom_call.1} parent=1 // pred_check
      _
    $region3: #{tpu_custom_call.1} parent=1 // pred_check_branch
      %9 = sbr.rel (0) target = $region5
    $region4: #{tpu_custom_call.1} parent=1 // pred_region
      _
    $region5: #{tpu_custom_call.1} parent=1 // pred_fallthru
      _
    // Predicated region
    $region6: #{tpu_custom_call.1} parent=1 // pred_check
      _
    $region7: #{tpu_custom_call.1} parent=1 // pred_check_branch
      %11 = sbr.rel (0) target = $region9
    $region8: #{tpu_custom_call.1} parent=1 // pred_region
      _
    $region9: #{tpu_custom_call.1} parent=1 // pred_fallthru
      _
    %v12 = vld [vmem:[%s0] sm:$0xff]
    %v13 = vld [vmem:[%s1] sm:$0xff]
    %vm14 = vcmask 130048
    %v15 = vsel %vm14, %v12, -inf
    %16 = vmax.xlane.f32.xlu0 %v15
    %v17 = vpop.xlane.xlu0 %16
    %v18 = vsub.f32 %v12, %v17
    %v19 = vmul.f32 %v18, 1.442695
    %v20 = vpow.pop %v19
    %v21 = vsel %vm14, %v20, 0.0
    %22 = vadd.xlane.f32.xlu0 %v21
    %v23 = vpop.xlane.xlu0 %22
    %v24 = vlaneseq
    %v25 = vand.u32 %v24, 127
    %26 = vset.pattern.permute.xlu0 0
    %27 = vperm.xlu0 %26, %v13
    %v28 = vpop.permute.xlu0 %27
    %vm29 = vcmp.eq.s32.totalorder %v25, %v28
    %v30 = vsel %vm29, %v12, 0.0
    %v31 = vsel %vm14, %v30, 0.0
    %32 = vadd.xlane.f32.xlu0 %v31
    %v33 = vpop.xlane.xlu0 %32
    %v34 = vlog2.pop %v23
    %v35 = vmul.f32 %v34, 0.6931472
    %v36 = vadd.f32 %v35, %v17
    %v37 = vsub.f32 %v36, %v33
    %v38 = vsub.f32 0.0, %v37
    %v39 = vmul.f32 %v38, 1.442695
    %v40 = vpow.pop %v39
    %v41 = vsub.f32 1.0, %v40
    %v42 = vmul.f32 %v41, %v41
    %v43 = vmul.f32 %v42, %v37
    %vm44 = vcmask 7168
    %v45 = vsel %vm44, %v43, 0.0
    %46 = vadd.xlane.f32.xlu0 %v45
    %v47 = vpop.xlane.xlu0 %46
    %v48 = vrot.slane %v47, 4
    %v49 = vadd.f32 %v47, %v48
    %v50 = vrot.slane %v49, 2
    %v51 = vadd.f32 %v49, %v50
    %v52 = vrot.slane %v51, 1
    %v53 = vadd.f32 %v51, %v52
    %s54 = vtos %v53
    %v55 = vstv %s54
    %56 = vst [vmem:[#allocation2] sm:$0x1] %v55
    // Predicated region
    $region10: #{tpu_custom_call.1} parent=1 // pred_check
      _
    $region11: #{tpu_custom_call.1} parent=1 // pred_check_branch
      %58 = sbr.rel (0) target = $region13
    $region12: #{tpu_custom_call.1} parent=1 // pred_region
      %s60 = ssub.s32 16, 16
      %61 = vsyncadd [#allocation3], %s60
      %s63 = sshll.u32 [#allocation2], 4
      %s64 = int_to_ptr.vmem [resolvable:$true] %s63
      %66 = dma.vmem_to_hbm [thread:$0]  %s64, 16, %s2, [#allocation3]
    $region13: #{tpu_custom_call.1} parent=1 // pred_fallthru
      _
    // Predicated region
    $region14: #{tpu_custom_call.1} parent=1 // pred_check
      _
    $region15: #{tpu_custom_call.1} parent=1 // pred_check_branch
      %68 = sbr.rel (0) target = $region17
    $region16: #{tpu_custom_call.1} parent=1 // pred_region
      %69 = dma.done [#allocation3], 16
    $region17: #{tpu_custom_call.1} parent=1 // pred_fallthru
      _
    %70 = vsyncpa [#allocation3], 1

</llo_original>
